<compile_context>
chip_gen: v6e
topology: v6e:2x2x1
jax: 0.10.0
libtpu: 0.0.40
codegen_flags: <defaults>
</compile_context>

<pallas_src>
import functools

import jax
import jax.numpy as jnp
from jax import lax
from jax.experimental import pallas as pl
from jax.experimental.pallas import tpu as pltpu

LN_EPS = 1e-5  # PyTorch nn.LayerNorm default


def _round_up(x, m):
    return (x + m - 1) // m * m


def _patch_embed_kernel(x_ref, w_ref, b_ref, g_ref, beta_ref, o_ref, *, inv_n):
    # Conv-as-matmul over im2col patches; f32 accumulation on the MXU.
    acc = jnp.dot(x_ref[...], w_ref[...], preferred_element_type=jnp.float32)
    acc = acc + b_ref[...]                         # bias, (1, Op) -> (tm, Op)
    # LayerNorm over the (zero-padded) embedding axis.  Padded weight/bias
    # columns are exactly zero, so sums over Op equal sums over the real O
    # columns; divide by the real O through the static inv_n constant
    # (sum * const instead of jnp.mean) and use E[x^2]-E[x]^2 so the padded
    # zero columns never bias the variance.
    mean = jnp.sum(acc, axis=-1, keepdims=True) * inv_n
    msq = jnp.sum(acc * acc, axis=-1, keepdims=True) * inv_n
    var = msq - mean * mean                        # biased var, as in PyTorch LN
    normed = (acc - mean) * lax.rsqrt(var + LN_EPS)
    o_ref[...] = (normed * g_ref[...] + beta_ref[...]).astype(o_ref.dtype)


def overlap_patch_embed(x, w, b, gamma, beta, *, stride=2, padding=1,
                        tm=512, compute_dtype=jnp.bfloat16):
    """x: (B, C, H, W) NCHW; w: (O, C, KH, KW); returns ((B, Ho*Wo, O), Ho, Wo)."""
    B, C, H, W = x.shape
    O, _, KH, KW = w.shape
    Ho = (H + 2 * padding - KH) // stride + 1
    Wo = (W + 2 * padding - KW) // stride + 1
    K = C * KH * KW
    M = B * Ho * Wo

    # 128-aligned contraction (Kp) and output-lane (Op) dims; 128-multiple row
    # tile; token count padded to the tile (tail handled by zero rows, sliced
    # off after the kernel).  Keeps every store unmasked and the MXU fed.
    Kp = _round_up(K, 128)
    Op = _round_up(O, 128)
    tm = max(128, _round_up(min(tm, M), 128))
    Mp = _round_up(M, tm)

    # --- glue: im2col (matches torch Conv2d weight flattening order c,kh,kw) ---
    # TODO(synk): fuse the patch gather into the kernel (manual DMA over the
    # padded NHWC input) to avoid materializing the (M, K) im2col matrix in HBM.
    xp = jnp.pad(x, ((0, 0), (0, 0), (padding, padding), (padding, padding)))
    cols = jnp.stack(
        [xp[:, :, kh:kh + stride * Ho:stride, kw:kw + stride * Wo:stride]
         for kh in range(KH) for kw in range(KW)],
        axis=2,
    )                                               # (B, C, KH*KW, Ho, Wo)
    cols = cols.reshape(B, K, Ho, Wo).transpose(0, 2, 3, 1).reshape(M, K)
    cols = jnp.pad(cols, ((0, Mp - M), (0, Kp - K))).astype(compute_dtype)

    w_mat = jnp.pad(w.reshape(O, K).T, ((0, Kp - K), (0, Op - O)))
    w_mat = w_mat.astype(compute_dtype)                                 # (Kp, Op)
    b_p = jnp.pad(b, (0, Op - O)).reshape(1, Op).astype(jnp.float32)
    g_p = jnp.pad(gamma, (0, Op - O)).reshape(1, Op).astype(jnp.float32)
    beta_p = jnp.pad(beta, (0, Op - O)).reshape(1, Op).astype(jnp.float32)

    kernel = functools.partial(_patch_embed_kernel, inv_n=1.0 / O)

    out = pl.pallas_call(
        kernel,
        out_shape=jax.ShapeDtypeStruct((Mp, Op), x.dtype),
        grid_spec=pltpu.PrefetchScalarGridSpec(
            num_scalar_prefetch=0,
            grid=(Mp // tm,),
            in_specs=[
                pl.BlockSpec((tm, Kp), lambda i: (i, 0)),   # im2col rows (bf16)
                pl.BlockSpec((Kp, Op), lambda i: (0, 0)),   # conv weight (resident)
                pl.BlockSpec((1, Op), lambda i: (0, 0)),    # conv bias (f32)
                pl.BlockSpec((1, Op), lambda i: (0, 0)),    # LN gamma (f32)
                pl.BlockSpec((1, Op), lambda i: (0, 0)),    # LN beta  (f32)
            ],
            out_specs=pl.BlockSpec((tm, Op), lambda i: (i, 0)),
        ),
        compiler_params=pltpu.CompilerParams(
            dimension_semantics=("parallel",)),
    )(cols, w_mat, b_p, g_p, beta_p)

    return out[:M, :O].reshape(B, Ho * Wo, O), Ho, Wo


def _reference(x, w, b, gamma, beta, *, stride=2, padding=1):
    # Pure-JAX f32 reference: conv + flatten/transpose + layernorm.
    y = lax.conv_general_dilated(
        x, w, window_strides=(stride, stride),
        padding=((padding, padding), (padding, padding)),
        dimension_numbers=("NCHW", "OIHW", "NCHW"),
    ) + b.reshape(1, -1, 1, 1)
    B, O, Ho, Wo = y.shape
    y = y.reshape(B, O, Ho * Wo).transpose(0, 2, 1)     # (B, L, O)
    mean = jnp.mean(y, axis=-1, keepdims=True)
    var = jnp.mean((y - mean) ** 2, axis=-1, keepdims=True)
    y = (y - mean) * lax.rsqrt(var + LN_EPS) * gamma + beta
    return y, Ho, Wo


if __name__ == "__main__":
    # Small shapes consistent with the module: B=2, in_c=4, 16x16, embed_dim=32.
    B, C, H, W = 2, 4, 16, 16
    EMBED, KSZ = 32, 3

    key = jax.random.PRNGKey(0)
    kx, kw, kb = jax.random.split(key, 3)
    x = jax.random.normal(kx, (B, C, H, W), dtype=jnp.float32)

    # Deterministic synthetic parameters (Conv2d weight/bias; LayerNorm defaults).
    fan_in = C * KSZ * KSZ
    bound = 1.0 / (fan_in ** 0.5)
    w = jax.random.uniform(kw, (EMBED, C, KSZ, KSZ), jnp.float32, -bound, bound)
    b = jax.random.uniform(kb, (EMBED,), jnp.float32, -bound, bound)
    gamma = jnp.ones((EMBED,), jnp.float32)   # nn.LayerNorm default weight
    beta = jnp.zeros((EMBED,), jnp.float32)   # nn.LayerNorm default bias

    ref, Ho_ref, Wo_ref = _reference(x, w, b, gamma, beta)

    # f32 operand path: must match the PyTorch-equivalent reference tightly.
    out32, Ho, Wo = overlap_patch_embed(x, w, b, gamma, beta,
                                        compute_dtype=jnp.float32)
    out32 = jax.block_until_ready(out32)
    assert (Ho, Wo) == (Ho_ref, Wo_ref) == (8, 8)
    assert out32.shape == (B, Ho * Wo, EMBED)
    assert jnp.allclose(out32, ref, rtol=1e-4, atol=1e-4), "f32 mismatch vs reference"

    # Default fast path: bf16 matmul operands, f32 accumulation + f32 LayerNorm.
    out_bf, Ho, Wo = overlap_patch_embed(x, w, b, gamma, beta)
    out_bf = jax.block_until_ready(out_bf)
    assert out_bf.shape == (B, Ho * Wo, EMBED)
    assert jnp.allclose(out_bf, ref, rtol=6e-2, atol=6e-2), "bf16 mismatch vs reference"

    print("KERNEL_OK")
</pallas_src>

<mosaic_0001>
module attributes {stable_mosaic.version = 11 : i64} {
  func.func @_patch_embed_kernel(%arg0: i32, %arg1: memref<128x128xf32, #tpu.memory_space<vmem>>, %arg2: memref<128x128xf32, #tpu.memory_space<vmem>>, %arg3: memref<1x128xf32, #tpu.memory_space<vmem>>, %arg4: memref<1x128xf32, #tpu.memory_space<vmem>>, %arg5: memref<1x128xf32, #tpu.memory_space<vmem>>, %arg6: memref<128x128xf32, #tpu.memory_space<vmem>>) attributes {dimension_semantics = [#tpu.dimension_semantics<parallel>], iteration_bounds = array<i64: 1>, scalar_prefetch = 0 : i64, scratch_operands = 0 : i64, tpu.core_type = #tpu.core_type<tc>, window_params = [{transform_indices = @transform_0, window_bounds = array<i64: 128, 128>}, {pipeline_mode = #tpu.pipeline_mode<synchronous>, transform_indices = @transform_1, window_bounds = array<i64: 128, 128>}, {pipeline_mode = #tpu.pipeline_mode<synchronous>, transform_indices = @transform_2, window_bounds = array<i64: 1, 128>}, {pipeline_mode = #tpu.pipeline_mode<synchronous>, transform_indices = @transform_3, window_bounds = array<i64: 1, 128>}, {pipeline_mode = #tpu.pipeline_mode<synchronous>, transform_indices = @transform_4, window_bounds = array<i64: 1, 128>}, {transform_indices = @transform_5, window_bounds = array<i64: 128, 128>}]} {
    %c0 = arith.constant 0 : index
    %c0_0 = arith.constant 0 : index
    %0 = vector.load %arg1[%c0, %c0_0] : memref<128x128xf32, #tpu.memory_space<vmem>>, vector<128x128xf32>
    %c0_1 = arith.constant 0 : index
    %c0_2 = arith.constant 0 : index
    %1 = vector.load %arg2[%c0_1, %c0_2] : memref<128x128xf32, #tpu.memory_space<vmem>>, vector<128x128xf32>
    %cst = arith.constant dense<0.000000e+00> : vector<128x128xf32>
    %2 = tpu.matmul %0, %1, %cst {dimension_numbers = #tpu.dot_dimension_numbers<[1], [0], [0], [1], [0, 0, 1, 1], [], []>} : vector<128x128xf32>, vector<128x128xf32>, vector<128x128xf32> -> vector<128x128xf32>
    %c0_3 = arith.constant 0 : index
    %c0_4 = arith.constant 0 : index
    %3 = vector.load %arg3[%c0_3, %c0_4] : memref<1x128xf32, #tpu.memory_space<vmem>>, vector<1x128xf32>
    %4 = vector.broadcast %3 : vector<1x128xf32> to vector<128x128xf32>
    %5 = arith.addf %2, %4 : vector<128x128xf32>
    %cst_5 = arith.constant dense<0.000000e+00> : vector<128xf32>
    %6 = vector.multi_reduction <add>, %5, %cst_5 [1] : vector<128x128xf32> to vector<128xf32>
    %7 = vector.shape_cast %6 : vector<128xf32> to vector<128x1xf32>
    %cst_6 = arith.constant 3.125000e-02 : f32
    %8 = vector.broadcast %cst_6 : f32 to vector<128x1xf32>
    %9 = arith.mulf %7, %8 : vector<128x1xf32>
    %10 = arith.mulf %5, %5 : vector<128x128xf32>
    %cst_7 = arith.constant dense<0.000000e+00> : vector<128xf32>
    %11 = vector.multi_reduction <add>, %10, %cst_7 [1] : vector<128x128xf32> to vector<128xf32>
    %12 = vector.shape_cast %11 : vector<128xf32> to vector<128x1xf32>
    %cst_8 = arith.constant 3.125000e-02 : f32
    %13 = vector.broadcast %cst_8 : f32 to vector<128x1xf32>
    %14 = arith.mulf %12, %13 : vector<128x1xf32>
    %15 = arith.mulf %9, %9 : vector<128x1xf32>
    %16 = arith.subf %14, %15 : vector<128x1xf32>
    %17 = vector.broadcast %9 : vector<128x1xf32> to vector<128x128xf32>
    %18 = arith.subf %5, %17 : vector<128x128xf32>
    %cst_9 = arith.constant 9.99999974E-6 : f32
    %19 = vector.broadcast %cst_9 : f32 to vector<128x1xf32>
    %20 = arith.addf %16, %19 : vector<128x1xf32>
    %21 = math.rsqrt %20 : vector<128x1xf32>
    %22 = vector.broadcast %21 : vector<128x1xf32> to vector<128x128xf32>
    %23 = arith.mulf %18, %22 : vector<128x128xf32>
    %c0_10 = arith.constant 0 : index
    %c0_11 = arith.constant 0 : index
    %24 = vector.load %arg4[%c0_10, %c0_11] : memref<1x128xf32, #tpu.memory_space<vmem>>, vector<1x128xf32>
    %25 = vector.broadcast %24 : vector<1x128xf32> to vector<128x128xf32>
    %26 = arith.mulf %23, %25 : vector<128x128xf32>
    %c0_12 = arith.constant 0 : index
    %c0_13 = arith.constant 0 : index
    %27 = vector.load %arg5[%c0_12, %c0_13] : memref<1x128xf32, #tpu.memory_space<vmem>>, vector<1x128xf32>
    %28 = vector.broadcast %27 : vector<1x128xf32> to vector<128x128xf32>
    %29 = arith.addf %26, %28 : vector<128x128xf32>
    %c0_14 = arith.constant 0 : index
    %c0_15 = arith.constant 0 : index
    %30 = vector.load %arg6[%c0_14, %c0_15] : memref<128x128xf32, #tpu.memory_space<vmem>>, vector<128x128xf32>
    tpu.vector_store %arg6[%c0_14, %c0_15], %29 {strides = array<i32>} : memref<128x128xf32, #tpu.memory_space<vmem>>, vector<128x128xf32>,
    return
  }
  func.func @transform_0(%arg0: i32) -> (i32, i32) {
    %c0_i32 = arith.constant 0 : i32
    %c0_i32_0 = arith.constant 0 : i32
    return %arg0, %c0_i32 : i32, i32
  }
  func.func @transform_1(%arg0: i32) -> (i32, i32) {
    %c0_i32 = arith.constant 0 : i32
    %c0_i32_0 = arith.constant 0 : i32
    %c0_i32_1 = arith.constant 0 : i32
    return %c0_i32, %c0_i32_0 : i32, i32
  }
  func.func @transform_2(%arg0: i32) -> (i32, i32) {
    %c0_i32 = arith.constant 0 : i32
    %c0_i32_0 = arith.constant 0 : i32
    %c0_i32_1 = arith.constant 0 : i32
    return %c0_i32, %c0_i32_0 : i32, i32
  }
  func.func @transform_3(%arg0: i32) -> (i32, i32) {
    %c0_i32 = arith.constant 0 : i32
    %c0_i32_0 = arith.constant 0 : i32
    %c0_i32_1 = arith.constant 0 : i32
    return %c0_i32, %c0_i32_0 : i32, i32
  }
  func.func @transform_4(%arg0: i32) -> (i32, i32) {
    %c0_i32 = arith.constant 0 : i32
    %c0_i32_0 = arith.constant 0 : i32
    %c0_i32_1 = arith.constant 0 : i32
    return %c0_i32, %c0_i32_0 : i32, i32
  }
  func.func @transform_5(%arg0: i32) -> (i32, i32) {
    %c0_i32 = arith.constant 0 : i32
    %c0_i32_0 = arith.constant 0 : i32
    return %arg0, %c0_i32 : i32, i32
  }
}

</mosaic_0001>

<llo_original>
// kernel: tpu_custom_call.1
$region0: #{tpu_custom_call.1}
  #allocation0 [shape = 'u32[]', space=smem, size = 0x4, offset = 0x4, fixed_abs, tag = 'smem constant byte address 0x4 - core index']
  #allocation1 [shape = 'u32[144,128]{1,0:T(1,128)}', space=vmem, size = 0x12000, scoped, tag = 'internal scratch']
  %s0 = inlined_call_operand.hbm [shape: f32[128,128], index: 0, kind: input, shape index: {}]
  %s1 = inlined_call_operand.hbm [shape: f32[128,128], index: 1, kind: input, shape index: {}]
  %s2 = inlined_call_operand.vmem [shape: f32[1,128], index: 2, kind: input, shape index: {}]
  %s3 = inlined_call_operand.vmem [shape: f32[1,128], index: 3, kind: input, shape index: {}]
  %s4 = inlined_call_operand.vmem [shape: f32[1,128], index: 4, kind: input, shape index: {}]
  %s5 = inlined_call_operand.hbm [shape: f32[128,128], index: 5, kind: output, shape index: {}]
  %s6 = sld [smem:[#allocation0]]
  $region38: #{tpu_custom_call.1} parent=0
    _
  %s8 = ssub.s32 1, %s6
  %s9 = scalar_select 0, %s8, %s6
  $region1: #{tpu_custom_call.1} parent=0
    #allocation2 [shape = 'u8[65536]{0}', space=vmem, size = 0x10000, scoped, tag = 'input window, operand 0, single buffered']
    #allocation3 [shape = 's32[1]{0}', space=sflag, size = 0x4, scoped, tag = 'scoped memory for tpu_custom_call.1']
    #allocation4 [shape = 's32[1]{0}', space=sflag, size = 0x4, scoped, tag = 'scoped memory for tpu_custom_call.1']
    #allocation5 [shape = 'u8[65536]{0}', space=vmem, size = 0x10000, scoped, tag = 'input window, operand 1, single buffered']
    #allocation6 [shape = 's32[1]{0}', space=sflag, size = 0x4, scoped, tag = 'scoped memory for tpu_custom_call.1']
    #allocation7 [shape = 'u8[65536]{0}', space=vmem, size = 0x10000, scoped, tag = 'output window, operand 0, single buffered']
    %10 = vsyncpa [#allocation3], 0
    %11 = vsyncpa [#allocation6], 0
    %12 = vsyncpa [#allocation4], 0
    // Predicated region
    $region2: #{tpu_custom_call.1} parent=1 // pred_check
      _
    $region3: #{tpu_custom_call.1} parent=1 // pred_check_branch
      %14 = sbr.rel (0) target = $region5
    $region4: #{tpu_custom_call.1} parent=1 // pred_region
      %s16 = ssub.s32 2048, 2048
      %17 = vsyncadd [#allocation3], %s16
      %s18 = sshll.u32 [#allocation2], 4
      %s19 = int_to_ptr.vmem [resolvable:$true] %s18
      %24 = dma.hbm_to_vmem [thread:$0]  %s0, 2048, %s19, [#allocation3], 128, 128, 8
    $region5: #{tpu_custom_call.1} parent=1 // pred_fallthru
      _
    // Predicated region
    $region6: #{tpu_custom_call.1} parent=1 // pred_check
      _
    $region7: #{tpu_custom_call.1} parent=1 // pred_check_branch
      %26 = sbr.rel (0) target = $region9
    $region8: #{tpu_custom_call.1} parent=1 // pred_region
      %s28 = ssub.s32 2048, 2048
      %29 = vsyncadd [#allocation6], %s28
      %s30 = sshll.u32 [#allocation5], 4
      %s31 = int_to_ptr.vmem [resolvable:$true] %s30
      %36 = dma.hbm_to_vmem [thread:$0]  %s1, 2048, %s31, [#allocation6], 128, 128, 8
    $region9: #{tpu_custom_call.1} parent=1 // pred_fallthru
      _
    // Predicated region
    $region10: #{tpu_custom_call.1} parent=1 // pred_check
      _
    $region11: #{tpu_custom_call.1} parent=1 // pred_check_branch
      %38 = sbr.rel (0) target = $region13
    $region12: #{tpu_custom_call.1} parent=1 // pred_region
      _
    $region13: #{tpu_custom_call.1} parent=1 // pred_fallthru
      _
    // Predicated region
    $region14: #{tpu_custom_call.1} parent=1 // pred_check
      _
    $region15: #{tpu_custom_call.1} parent=1 // pred_check_branch
      %40 = sbr.rel (0) target = $region17
    $region16: #{tpu_custom_call.1} parent=1 // pred_region
      _
    $region17: #{tpu_custom_call.1} parent=1 // pred_fallthru
      _
    // Predicated region
    $region18: #{tpu_custom_call.1} parent=1 // pred_check
      _
    $region19: #{tpu_custom_call.1} parent=1 // pred_check_branch
      %42 = sbr.rel (0) target = $region21
    $region20: #{tpu_custom_call.1} parent=1 // pred_region
      _
    $region21: #{tpu_custom_call.1} parent=1 // pred_fallthru
      _
    // Predicated region
    $region22: #{tpu_custom_call.1} parent=1 // pred_check
      _
    $region23: #{tpu_custom_call.1} parent=1 // pred_check_branch
      %44 = sbr.rel (0) target = $region25
    $region24: #{tpu_custom_call.1} parent=1 // pred_region
      %45 = dma.done [#allocation3], 2048
    $region25: #{tpu_custom_call.1} parent=1 // pred_fallthru
      _
    // Predicated region
    $region26: #{tpu_custom_call.1} parent=1 // pred_check
      _
    $region27: #{tpu_custom_call.1} parent=1 // pred_check_branch
      %47 = sbr.rel (0) target = $region29
    $region28: #{tpu_custom_call.1} parent=1 // pred_region
      %48 = dma.done [#allocation6], 2048
    $region29: #{tpu_custom_call.1} parent=1 // pred_fallthru
      _
    %v49 = vld [vmem:[#allocation2] sm:$0xff]
    %v50 = vld [vmem:[#allocation2 + $0x8] sm:$0xff]
    %v51 = vld [vmem:[#allocation2 + $0x10] sm:$0xff]
    %v52 = vld [vmem:[#allocation2 + $0x18] sm:$0xff]
    %v53 = vld [vmem:[#allocation2 + $0x20] sm:$0xff]
    %v54 = vld [vmem:[#allocation2 + $0x28] sm:$0xff]
    %v55 = vld [vmem:[#allocation2 + $0x30] sm:$0xff]
    %v56 = vld [vmem:[#allocation2 + $0x38] sm:$0xff]
    %v57 = vld [vmem:[#allocation2 + $0x40] sm:$0xff]
    %v58 = vld [vmem:[#allocation2 + $0x48] sm:$0xff]
    %v59 = vld [vmem:[#allocation2 + $0x50] sm:$0xff]
    %v60 = vld [vmem:[#allocation2 + $0x58] sm:$0xff]
    %v61 = vld [vmem:[#allocation2 + $0x60] sm:$0xff]
    %v62 = vld [vmem:[#allocation2 + $0x68] sm:$0xff]
    %v63 = vld [vmem:[#allocation2 + $0x70] sm:$0xff]
    %v64 = vld [vmem:[#allocation2 + $0x78] sm:$0xff]
    %v65 = vld [vmem:[#allocation5] sm:$0xff]
    %v66 = vld [vmem:[#allocation5 + $0x8] sm:$0xff]
    %v67 = vld [vmem:[#allocation5 + $0x10] sm:$0xff]
    %v68 = vld [vmem:[#allocation5 + $0x18] sm:$0xff]
    %v69 = vld [vmem:[#allocation5 + $0x20] sm:$0xff]
    %v70 = vld [vmem:[#allocation5 + $0x28] sm:$0xff]
    %v71 = vld [vmem:[#allocation5 + $0x30] sm:$0xff]
    %v72 = vld [vmem:[#allocation5 + $0x38] sm:$0xff]
    %v73 = vld [vmem:[#allocation5 + $0x40] sm:$0xff]
    %v74 = vld [vmem:[#allocation5 + $0x48] sm:$0xff]
    %v75 = vld [vmem:[#allocation5 + $0x50] sm:$0xff]
    %v76 = vld [vmem:[#allocation5 + $0x58] sm:$0xff]
    %v77 = vld [vmem:[#allocation5 + $0x60] sm:$0xff]
    %v78 = vld [vmem:[#allocation5 + $0x68] sm:$0xff]
    %v79 = vld [vmem:[#allocation5 + $0x70] sm:$0xff]
    %v80 = vld [vmem:[#allocation5 + $0x78] sm:$0xff]
    %v81 = vld [vmem:[%s2] sm:$0x1]
    %v83 = vlaneseq
    %v84 = vshrl.u32 %v83, 7
    %v85 = vsub.s32 0, %v84
    %v86 = vrot.slane %v81, %v85
    %88 = vmatprep.subr.mxu0 0.0
    %89 = vmatpush1.msra.mxu0 %v80
    %90 = vmatprep.subr.mxu0 0.0
    %91 = vmatpush1.msra.mxu0 %v79
    %92 = vmatprep.subr.mxu0 0.0
    %93 = vmatpush1.msra.mxu0 %v78
    %94 = vmatprep.subr.mxu0 0.0
    %95 = vmatpush1.msra.mxu0 %v77
    %96 = vmatprep.subr.mxu0 0.0
    %97 = vmatpush1.msra.mxu0 %v76
    %98 = vmatprep.subr.mxu0 0.0
    %99 = vmatpush1.msra.mxu0 %v75
    %100 = vmatprep.subr.mxu0 0.0
    %101 = vmatpush1.msra.mxu0 %v74
    %102 = vmatprep.subr.mxu0 0.0
    %103 = vmatpush1.msra.mxu0 %v73
    %104 = vmatprep.subr.mxu0 0.0
    %105 = vmatpush1.msra.mxu0 %v72
    %106 = vmatprep.subr.mxu0 0.0
    %107 = vmatpush1.msra.mxu0 %v71
    %108 = vmatprep.subr.mxu0 0.0
    %109 = vmatpush1.msra.mxu0 %v70
    %110 = vmatprep.subr.mxu0 0.0
    %111 = vmatpush1.msra.mxu0 %v69
    %112 = vmatprep.subr.mxu0 0.0
    %113 = vmatpush1.msra.mxu0 %v68
    %114 = vmatprep.subr.mxu0 0.0
    %115 = vmatpush1.msra.mxu0 %v67
    %116 = vmatprep.subr.mxu0 0.0
    %117 = vmatpush1.msra.mxu0 %v66
    %118 = vmatprep.subr.mxu0 0.0
    %119 = vmatpush1.msra.mxu0 %v65
    %120 = vmatprep.subr.mxu0 0.0
    %121 = vmatpush2.msra.mxu0 0.0
    %122 = vmatprep.subr.mxu0 0.0
    %123 = vmatpush2.msra.mxu0 0.0
    %124 = vmatprep.subr.mxu0 0.0
    %125 = vmatpush2.msra.mxu0 0.0
    %126 = vmatprep.subr.mxu0 0.0
    %127 = vmatpush2.msra.mxu0 0.0
    %128 = vmatprep.subr.mxu0 0.0
    %129 = vmatpush2.msra.mxu0 0.0
    %130 = vmatprep.subr.mxu0 0.0
    %131 = vmatpush2.msra.mxu0 0.0
    %132 = vmatprep.subr.mxu0 0.0
    %133 = vmatpush2.msra.mxu0 0.0
    %134 = vmatprep.subr.mxu0 0.0
    %135 = vmatpush2.msra.mxu0 0.0
    %136 = vmatprep.subr.mxu0 0.0
    %137 = vmatpush2.msra.mxu0 0.0
    %138 = vmatprep.subr.mxu0 0.0
    %139 = vmatpush2.msra.mxu0 0.0
    %140 = vmatprep.subr.mxu0 0.0
    %141 = vmatpush2.msra.mxu0 0.0
    %142 = vmatprep.subr.mxu0 0.0
    %143 = vmatpush2.msra.mxu0 0.0
    %144 = vmatprep.subr.mxu0 0.0
    %145 = vmatpush2.msra.mxu0 0.0
    %146 = vmatprep.subr.mxu0 0.0
    %147 = vmatpush2.msra.mxu0 0.0
    %148 = vmatprep.subr.mxu0 0.0
    %149 = vmatpush2.msra.mxu0 0.0
    %150 = vmatprep.subr.mxu0 0.0
    %151 = vmatpush2.msra.mxu0 0.0
    %152 = vmatprep.mubr.f32.mxu0 0.0
    %153 = vmatmul.mubr.f32.gmra.mxu0 %v49
    %v154 = vpop.f32.mrf.mxu0
    %v155 = vadd.f32 %v86, %v154
    %v156 = vpop.f32.mrf.mxu0
    %157 = vmatprep.mubr.f32.mxu0 0.0
    %158 = vmatmul.mubr.f32.gmra.mxu0 %v50
    %v159 = vpop.f32.mrf.mxu0
    %v160 = vadd.f32 %v86, %v159
    %v161 = vpop.f32.mrf.mxu0
    %162 = vmatprep.mubr.f32.mxu0 0.0
    %163 = vmatmul.mubr.f32.gmra.mxu0 %v51
    %v164 = vpop.f32.mrf.mxu0
    %v165 = vadd.f32 %v86, %v164
    %v166 = vpop.f32.mrf.mxu0
    %167 = vmatprep.mubr.f32.mxu0 0.0
    %168 = vmatmul.mubr.f32.gmra.mxu0 %v52
    %v169 = vpop.f32.mrf.mxu0
    %v170 = vadd.f32 %v86, %v169
    %v171 = vpop.f32.mrf.mxu0
    %172 = vmatprep.mubr.f32.mxu0 0.0
    %173 = vmatmul.mubr.f32.gmra.mxu0 %v53
    %v174 = vpop.f32.mrf.mxu0
    %v175 = vadd.f32 %v86, %v174
    %v176 = vpop.f32.mrf.mxu0
    %177 = vmatprep.mubr.f32.mxu0 0.0
    %178 = vmatmul.mubr.f32.gmra.mxu0 %v54
    %v179 = vpop.f32.mrf.mxu0
    %v180 = vadd.f32 %v86, %v179
    %v181 = vpop.f32.mrf.mxu0
    %182 = vmatprep.mubr.f32.mxu0 0.0
    %183 = vmatmul.mubr.f32.gmra.mxu0 %v55
    %v184 = vpop.f32.mrf.mxu0
    %v185 = vadd.f32 %v86, %v184
    %v186 = vpop.f32.mrf.mxu0
    %187 = vmatprep.mubr.f32.mxu0 0.0
    %188 = vmatmul.mubr.f32.gmra.mxu0 %v56
    %v189 = vpop.f32.mrf.mxu0
    %v190 = vadd.f32 %v86, %v189
    %v191 = vpop.f32.mrf.mxu0
    %192 = vmatprep.mubr.f32.mxu0 0.0
    %193 = vmatmul.mubr.f32.gmra.mxu0 %v57
    %v194 = vpop.f32.mrf.mxu0
    %v195 = vadd.f32 %v86, %v194
    %v196 = vpop.f32.mrf.mxu0
    %197 = vmatprep.mubr.f32.mxu0 0.0
    %198 = vmatmul.mubr.f32.gmra.mxu0 %v58
    %v199 = vpop.f32.mrf.mxu0
    %v200 = vadd.f32 %v86, %v199
    %v201 = vpop.f32.mrf.mxu0
    %202 = vmatprep.mubr.f32.mxu0 0.0
    %203 = vmatmul.mubr.f32.gmra.mxu0 %v59
    %v204 = vpop.f32.mrf.mxu0
    %v205 = vadd.f32 %v86, %v204
    %v206 = vpop.f32.mrf.mxu0
    %207 = vmatprep.mubr.f32.mxu0 0.0
    %208 = vmatmul.mubr.f32.gmra.mxu0 %v60
    %v209 = vpop.f32.mrf.mxu0
    %v210 = vadd.f32 %v86, %v209
    %v211 = vpop.f32.mrf.mxu0
    %212 = vmatprep.mubr.f32.mxu0 0.0
    %213 = vmatmul.mubr.f32.gmra.mxu0 %v61
    %v214 = vpop.f32.mrf.mxu0
    %v215 = vadd.f32 %v86, %v214
    %v216 = vpop.f32.mrf.mxu0
    %217 = vmatprep.mubr.f32.mxu0 0.0
    %218 = vmatmul.mubr.f32.gmra.mxu0 %v62
    %v219 = vpop.f32.mrf.mxu0
    %v220 = vadd.f32 %v86, %v219
    %v221 = vpop.f32.mrf.mxu0
    %222 = vmatprep.mubr.f32.mxu0 0.0
    %223 = vmatmul.mubr.f32.gmra.mxu0 %v63
    %v224 = vpop.f32.mrf.mxu0
    %v225 = vadd.f32 %v86, %v224
    %v226 = vpop.f32.mrf.mxu0
    %227 = vmatprep.mubr.f32.mxu0 0.0
    %228 = vmatmul.mubr.f32.gmra.mxu0 %v64
    %v229 = vpop.f32.mrf.mxu0
    %v230 = vadd.f32 %v86, %v229
    %v231 = vpop.f32.mrf.mxu0
    %232 = vdwg.mxu0
    %233 = vadd.xlane.f32.xlu0 %v155
    %v234 = vpop.xlane.xlu0 %233
    %235 = vadd.xlane.f32.xlu0 %v160
    %v236 = vpop.xlane.xlu0 %235
    %237 = vadd.xlane.f32.xlu0 %v165
    %v238 = vpop.xlane.xlu0 %237
    %239 = vadd.xlane.f32.xlu0 %v170
    %v240 = vpop.xlane.xlu0 %239
    %241 = vadd.xlane.f32.xlu0 %v175
    %v242 = vpop.xlane.xlu0 %241
    %243 = vadd.xlane.f32.xlu0 %v180
    %v244 = vpop.xlane.xlu0 %243
    %245 = vadd.xlane.f32.xlu0 %v185
    %v246 = vpop.xlane.xlu0 %245
    %247 = vadd.xlane.f32.xlu0 %v190
    %v248 = vpop.xlane.xlu0 %247
    %249 = vadd.xlane.f32.xlu0 %v195
    %v250 = vpop.xlane.xlu0 %249
    %251 = vadd.xlane.f32.xlu0 %v200
    %v252 = vpop.xlane.xlu0 %251
    %253 = vadd.xlane.f32.xlu0 %v205
    %v254 = vpop.xlane.xlu0 %253
    %255 = vadd.xlane.f32.xlu0 %v210
    %v256 = vpop.xlane.xlu0 %255
    %257 = vadd.xlane.f32.xlu0 %v215
    %v258 = vpop.xlane.xlu0 %257
    %259 = vadd.xlane.f32.xlu0 %v220
    %v260 = vpop.xlane.xlu0 %259
    %261 = vadd.xlane.f32.xlu0 %v225
    %v262 = vpop.xlane.xlu0 %261
    %263 = vadd.xlane.f32.xlu0 %v230
    %v264 = vpop.xlane.xlu0 %263
    %v265 = vmul.f32 %v234, 0.03125
    %v266 = vmul.f32 %v236, 0.03125
    %v267 = vmul.f32 %v238, 0.03125
    %v268 = vmul.f32 %v240, 0.03125
    %v269 = vmul.f32 %v242, 0.03125
    %v270 = vmul.f32 %v244, 0.03125
    %v271 = vmul.f32 %v246, 0.03125
    %v272 = vmul.f32 %v248, 0.03125
    %v273 = vmul.f32 %v250, 0.03125
    %v274 = vmul.f32 %v252, 0.03125
    %v275 = vmul.f32 %v254, 0.03125
    %v276 = vmul.f32 %v256, 0.03125
    %v277 = vmul.f32 %v258, 0.03125
    %v278 = vmul.f32 %v260, 0.03125
    %v279 = vmul.f32 %v262, 0.03125
    %v280 = vmul.f32 %v264, 0.03125
    %v281 = vmul.f32 %v155, %v155
    %v282 = vmul.f32 %v160, %v160
    %v283 = vmul.f32 %v165, %v165
    %v284 = vmul.f32 %v170, %v170
    %v285 = vmul.f32 %v175, %v175
    %v286 = vmul.f32 %v180, %v180
    %v287 = vmul.f32 %v185, %v185
    %v288 = vmul.f32 %v190, %v190
    %v289 = vmul.f32 %v195, %v195
    %v290 = vmul.f32 %v200, %v200
    %v291 = vmul.f32 %v205, %v205
    %v292 = vmul.f32 %v210, %v210
    %v293 = vmul.f32 %v215, %v215
    %v294 = vmul.f32 %v220, %v220
    %v295 = vmul.f32 %v225, %v225
    %v296 = vmul.f32 %v230, %v230
    %297 = vadd.xlane.f32.xlu0 %v281
    %v298 = vpop.xlane.xlu0 %297
    %299 = vadd.xlane.f32.xlu0 %v282
    %v300 = vpop.xlane.xlu0 %299
    %301 = vadd.xlane.f32.xlu0 %v283
    %v302 = vpop.xlane.xlu0 %301
    %303 = vadd.xlane.f32.xlu0 %v284
    %v304 = vpop.xlane.xlu0 %303
    %305 = vadd.xlane.f32.xlu0 %v285
    %v306 = vpop.xlane.xlu0 %305
    %307 = vadd.xlane.f32.xlu0 %v286
    %v308 = vpop.xlane.xlu0 %307
    %309 = vadd.xlane.f32.xlu0 %v287
    %v310 = vpop.xlane.xlu0 %309
    %311 = vadd.xlane.f32.xlu0 %v288
    %v312 = vpop.xlane.xlu0 %311
    %313 = vadd.xlane.f32.xlu0 %v289
    %v314 = vpop.xlane.xlu0 %313
    %315 = vadd.xlane.f32.xlu0 %v290
    %v316 = vpop.xlane.xlu0 %315
    %317 = vadd.xlane.f32.xlu0 %v291
    %v318 = vpop.xlane.xlu0 %317
    %319 = vadd.xlane.f32.xlu0 %v292
    %v320 = vpop.xlane.xlu0 %319
    %321 = vadd.xlane.f32.xlu0 %v293
    %v322 = vpop.xlane.xlu0 %321
    %323 = vadd.xlane.f32.xlu0 %v294
    %v324 = vpop.xlane.xlu0 %323
    %325 = vadd.xlane.f32.xlu0 %v295
    %v326 = vpop.xlane.xlu0 %325
    %327 = vadd.xlane.f32.xlu0 %v296
    %v328 = vpop.xlane.xlu0 %327
    %v329 = vmul.f32 %v298, 0.03125
    %v330 = vmul.f32 %v300, 0.03125
    %v331 = vmul.f32 %v302, 0.03125
    %v332 = vmul.f32 %v304, 0.03125
    %v333 = vmul.f32 %v306, 0.03125
    %v334 = vmul.f32 %v308, 0.03125
    %v335 = vmul.f32 %v310, 0.03125
    %v336 = vmul.f32 %v312, 0.03125
    %v337 = vmul.f32 %v314, 0.03125
    %v338 = vmul.f32 %v316, 0.03125
    %v339 = vmul.f32 %v318, 0.03125
    %v340 = vmul.f32 %v320, 0.03125
    %v341 = vmul.f32 %v322, 0.03125
    %v342 = vmul.f32 %v324, 0.03125
    %v343 = vmul.f32 %v326, 0.03125
    %v344 = vmul.f32 %v328, 0.03125
    %v345 = vmul.f32 %v265, %v265
    %v346 = vmul.f32 %v266, %v266
    %v347 = vmul.f32 %v267, %v267
    %v348 = vmul.f32 %v268, %v268
    %v349 = vmul.f32 %v269, %v269
    %v350 = vmul.f32 %v270, %v270
    %v351 = vmul.f32 %v271, %v271
    %v352 = vmul.f32 %v272, %v272
    %v353 = vmul.f32 %v273, %v273
    %v354 = vmul.f32 %v274, %v274
    %v355 = vmul.f32 %v275, %v275
    %v356 = vmul.f32 %v276, %v276
    %v357 = vmul.f32 %v277, %v277
    %v358 = vmul.f32 %v278, %v278
    %v359 = vmul.f32 %v279, %v279
    %v360 = vmul.f32 %v280, %v280
    %v361 = vsub.f32 %v329, %v345
    %v362 = vsub.f32 %v330, %v346
    %v363 = vsub.f32 %v331, %v347
    %v364 = vsub.f32 %v332, %v348
    %v365 = vsub.f32 %v333, %v349
    %v366 = vsub.f32 %v334, %v350
    %v367 = vsub.f32 %v335, %v351
    %v368 = vsub.f32 %v336, %v352
    %v369 = vsub.f32 %v337, %v353
    %v370 = vsub.f32 %v338, %v354
    %v371 = vsub.f32 %v339, %v355
    %v372 = vsub.f32 %v340, %v356
    %v373 = vsub.f32 %v341, %v357
    %v374 = vsub.f32 %v342, %v358
    %v375 = vsub.f32 %v343, %v359
    %v376 = vsub.f32 %v344, %v360
    %v377 = vsub.f32 %v155, %v265
    %v378 = vsub.f32 %v160, %v266
    %v379 = vsub.f32 %v165, %v267
    %v380 = vsub.f32 %v170, %v268
    %v381 = vsub.f32 %v175, %v269
    %v382 = vsub.f32 %v180, %v270
    %v383 = vsub.f32 %v185, %v271
    %v384 = vsub.f32 %v190, %v272
    %v385 = vsub.f32 %v195, %v273
    %v386 = vsub.f32 %v200, %v274
    %v387 = vsub.f32 %v205, %v275
    %v388 = vsub.f32 %v210, %v276
    %v389 = vsub.f32 %v215, %v277
    %v390 = vsub.f32 %v220, %v278
    %v391 = vsub.f32 %v225, %v279
    %v392 = vsub.f32 %v230, %v280
    %v393 = vadd.f32 %v361, 1e-05
    %v394 = vadd.f32 %v362, 1e-05
    %v395 = vadd.f32 %v363, 1e-05
    %v396 = vadd.f32 %v364, 1e-05
    %v397 = vadd.f32 %v365, 1e-05
    %v398 = vadd.f32 %v366, 1e-05
    %v399 = vadd.f32 %v367, 1e-05
    %v400 = vadd.f32 %v368, 1e-05
    %v401 = vadd.f32 %v369, 1e-05
    %v402 = vadd.f32 %v370, 1e-05
    %v403 = vadd.f32 %v371, 1e-05
    %v404 = vadd.f32 %v372, 1e-05
    %v405 = vadd.f32 %v373, 1e-05
    %v406 = vadd.f32 %v374, 1e-05
    %v407 = vadd.f32 %v375, 1e-05
    %v408 = vadd.f32 %v376, 1e-05
    %v409 = vrsqrt.pop %v393
    %v410 = vrsqrt.pop %v394
    %v411 = vrsqrt.pop %v395
    %v412 = vrsqrt.pop %v396
    %v413 = vrsqrt.pop %v397
    %v414 = vrsqrt.pop %v398
    %v415 = vrsqrt.pop %v399
    %v416 = vrsqrt.pop %v400
    %v417 = vrsqrt.pop %v401
    %v418 = vrsqrt.pop %v402
    %v419 = vrsqrt.pop %v403
    %v420 = vrsqrt.pop %v404
    %v421 = vrsqrt.pop %v405
    %v422 = vrsqrt.pop %v406
    %v423 = vrsqrt.pop %v407
    %v424 = vrsqrt.pop %v408
    %v425 = vmul.f32 %v377, %v409
    %v426 = vmul.f32 %v378, %v410
    %v427 = vmul.f32 %v379, %v411
    %v428 = vmul.f32 %v380, %v412
    %v429 = vmul.f32 %v381, %v413
    %v430 = vmul.f32 %v382, %v414
    %v431 = vmul.f32 %v383, %v415
    %v432 = vmul.f32 %v384, %v416
    %v433 = vmul.f32 %v385, %v417
    %v434 = vmul.f32 %v386, %v418
    %v435 = vmul.f32 %v387, %v419
    %v436 = vmul.f32 %v388, %v420
    %v437 = vmul.f32 %v389, %v421
    %v438 = vmul.f32 %v390, %v422
    %v439 = vmul.f32 %v391, %v423
    %v440 = vmul.f32 %v392, %v424
    %v441 = vld [vmem:[%s3] sm:$0x1]
    %v443 = vlaneseq
    %v444 = vshrl.u32 %v443, 7
    %v445 = vsub.s32 0, %v444
    %v446 = vrot.slane %v441, %v445
    %v448 = vmul.f32 %v425, %v446
    %v449 = vmul.f32 %v426, %v446
    %v450 = vmul.f32 %v427, %v446
    %v451 = vmul.f32 %v428, %v446
    %v452 = vmul.f32 %v429, %v446
    %v453 = vmul.f32 %v430, %v446
    %v454 = vmul.f32 %v431, %v446
    %v455 = vmul.f32 %v432, %v446
    %v456 = vmul.f32 %v433, %v446
    %v457 = vmul.f32 %v434, %v446
    %v458 = vmul.f32 %v435, %v446
    %v459 = vmul.f32 %v436, %v446
    %v460 = vmul.f32 %v437, %v446
    %v461 = vmul.f32 %v438, %v446
    %v462 = vmul.f32 %v439, %v446
    %v463 = vmul.f32 %v440, %v446
    %v464 = vld [vmem:[%s4] sm:$0x1]
    %v466 = vlaneseq
    %v467 = vshrl.u32 %v466, 7
    %v468 = vsub.s32 0, %v467
    %v469 = vrot.slane %v464, %v468
    %v471 = vadd.f32 %v448, %v469
    %v472 = vadd.f32 %v449, %v469
    %v473 = vadd.f32 %v450, %v469
    %v474 = vadd.f32 %v451, %v469
    %v475 = vadd.f32 %v452, %v469
    %v476 = vadd.f32 %v453, %v469
    %v477 = vadd.f32 %v454, %v469
    %v478 = vadd.f32 %v455, %v469
    %v479 = vadd.f32 %v456, %v469
    %v480 = vadd.f32 %v457, %v469
    %v481 = vadd.f32 %v458, %v469
    %v482 = vadd.f32 %v459, %v469
    %v483 = vadd.f32 %v460, %v469
    %v484 = vadd.f32 %v461, %v469
    %v485 = vadd.f32 %v462, %v469
    %v486 = vadd.f32 %v463, %v469
    %487 = vst [vmem:[#allocation7] sm:$0xff] %v471
    %488 = vst [vmem:[#allocation7 + $0x8] sm:$0xff] %v472
    %489 = vst [vmem:[#allocation7 + $0x10] sm:$0xff] %v473
    %490 = vst [vmem:[#allocation7 + $0x18] sm:$0xff] %v474
    %491 = vst [vmem:[#allocation7 + $0x20] sm:$0xff] %v475
    %492 = vst [vmem:[#allocation7 + $0x28] sm:$0xff] %v476
    %493 = vst [vmem:[#allocation7 + $0x30] sm:$0xff] %v477
    %494 = vst [vmem:[#allocation7 + $0x38] sm:$0xff] %v478
    %495 = vst [vmem:[#allocation7 + $0x40] sm:$0xff] %v479
    %496 = vst [vmem:[#allocation7 + $0x48] sm:$0xff] %v480
    %497 = vst [vmem:[#allocation7 + $0x50] sm:$0xff] %v481
    %498 = vst [vmem:[#allocation7 + $0x58] sm:$0xff] %v482
    %499 = vst [vmem:[#allocation7 + $0x60] sm:$0xff] %v483
    %500 = vst [vmem:[#allocation7 + $0x68] sm:$0xff] %v484
    %501 = vst [vmem:[#allocation7 + $0x70] sm:$0xff] %v485
    %502 = vst [vmem:[#allocation7 + $0x78] sm:$0xff] %v486
    // Predicated region
    $region30: #{tpu_custom_call.1} parent=1 // pred_check
      _
    $region31: #{tpu_custom_call.1} parent=1 // pred_check_branch
      %504 = sbr.rel (0) target = $region33
    $region32: #{tpu_custom_call.1} parent=1 // pred_region
      %s506 = ssub.s32 2048, 2048
      %507 = vsyncadd [#allocation4], %s506
      %s508 = sshll.u32 [#allocation7], 4
      %s509 = int_to_ptr.vmem [resolvable:$true] %s508
      %514 = dma.vmem_to_hbm [thread:$0]  %s509, 2048, %s5, [#allocation4], 128, 128, 8
    $region33: #{tpu_custom_call.1} parent=1 // pred_fallthru
      _
    // Predicated region
    $region34: #{tpu_custom_call.1} parent=1 // pred_check
      _
    $region35: #{tpu_custom_call.1} parent=1 // pred_check_branch
      %516 = sbr.rel (0) target = $region37
    $region36: #{tpu_custom_call.1} parent=1 // pred_region
      %517 = dma.done [#allocation4], 2048
    $region37: #{tpu_custom_call.1} parent=1 // pred_fallthru
      _
    %518 = vsyncpa [#allocation3], 1
    %519 = vsyncpa [#allocation6], 1
    %520 = vsyncpa [#allocation4], 1

</llo_original>
